<compile_context>
chip_gen: v6e
topology: v6e:2x2x1
jax: 0.10.0
libtpu: 0.0.40
codegen_flags: <defaults>
</compile_context>

<pallas_src>
import math

import jax
import jax.numpy as jnp
from jax.experimental import pallas as pl
from jax.experimental.pallas import tpu as pltpu


def _round_up(x, m):
    return ((x + m - 1) // m) * m


def _cubic_weight(t, A=-0.75):
    """Keys cubic convolution kernel with a=-0.75 (matches PyTorch bicubic). t=|dist| (f32)."""
    t2 = t * t
    t3 = t2 * t
    w_near = (A + 2.0) * t3 - (A + 3.0) * t2 + 1.0            # |d| <= 1
    w_far = A * t3 - 5.0 * A * t2 + 8.0 * A * t - 4.0 * A     # 1 < |d| < 2
    return jnp.where(t <= 1.0, w_near, jnp.where(t < 2.0, w_far, 0.0))


def _choose_row_tile(fh, fw_pad, target_tk):
    """Rows per K-tile.  TK = TH * fw_pad must be a multiple of 128 when fh is tiled."""
    q = 128 // math.gcd(fw_pad, 128)          # TH must be a multiple of q
    th = max(1, target_tk // fw_pad)
    th = _round_up(th, q)
    if th >= fh:
        return fh, fh                         # single K tile: TK == full HW dim
    return th, _round_up(fh, th)


def _make_kernel(tile_rows, fw_pad, feat_h, feat_w, norm_h, norm_w):
    def kernel(pos_ref, x_ref, out_ref, acc_ref):
        # pos_ref: [2, TN] f32, x_ref: [C, TK] compute_dtype, out_ref: [C, TN], acc: f32
        k = pl.program_id(2)

        @pl.when(k == 0)
        def _init():
            acc_ref[...] = jnp.zeros_like(acc_ref)

        # ---- coordinate math: always float32, independent of feature dtype ----------
        pos = pos_ref[...].astype(jnp.float32)                 # [2, TN]  (x, y) pixels
        px = pos[0:1, :]                                       # [1, TN]
        py = pos[1:2, :]
        # normgrid: map to [-1, 1] with the user-supplied (H, W)  (precondition: H,W > 1)
        gx = 2.0 * px / (norm_w - 1.0) - 1.0
        gy = 2.0 * py / (norm_h - 1.0) - 1.0
        # grid_sample unnormalization (align_corners=False) with the TRUE feature dims
        ix = ((gx + 1.0) * feat_w - 1.0) * 0.5                 # [1, TN]
        iy = ((gy + 1.0) * feat_h - 1.0) * 0.5

        tn = ix.shape[1]
        # ---- factored bicubic weights, built transposed (queries on the lane axis) ---
        hh = (jax.lax.broadcasted_iota(jnp.int32, (tile_rows, tn), 0)
              + k * tile_rows).astype(jnp.float32)             # feature rows of this tile
        ww = jax.lax.broadcasted_iota(jnp.int32, (fw_pad, tn), 0).astype(jnp.float32)
        wy_t = _cubic_weight(jnp.abs(hh - iy))                 # [TH, TN]
        wx_t = _cubic_weight(jnp.abs(ww - ix))                 # [FW, TN]
        # W^T[h*FW + w, n] = wy[h, n] * wx[w, n]; zero outside the 4x4 support and on
        # zero-padded rows/cols  =>  exactly grid_sample padding_mode='zeros'.
        w_t = (wy_t[:, None, :] * wx_t[None, :, :]).reshape(tile_rows * fw_pad, tn)

        acc_ref[...] += jnp.dot(x_ref[...], w_t.astype(x_ref.dtype),
                                preferred_element_type=jnp.float32)

        @pl.when(k == pl.num_programs(2) - 1)
        def _store():
            out_ref[...] = acc_ref[...].astype(out_ref.dtype)

    return kernel


def interpolate_sparse2d(x, pos, H, W, *, tile_n=256, target_tk=512,
                         compute_dtype=jnp.bfloat16):
    """x: [B, C, fh, fw], pos: [B, N, 2] pixel coords -> [B, N, C] (x.dtype)."""
    B, C, fh, fw = x.shape
    N = pos.shape[1]
    out_dtype = x.dtype

    # ---- feature-map padding / K tiling (TK = TH * fw_pad, multiple of 128 if tiled) ---
    fw_pad = _round_up(fw, 8)
    tile_rows, fh_pad = _choose_row_tile(fh, fw_pad, target_tk)
    hw_pad = fh_pad * fw_pad
    tk = tile_rows * fw_pad
    num_k = fh_pad // tile_rows

    xp = x
    if (fh_pad, fw_pad) != (fh, fw):
        xp = jnp.pad(x, ((0, 0), (0, 0), (0, fh_pad - fh), (0, fw_pad - fw)))
    # NCHW -> [B, C, HW]: free reshape; cast MXU operand once in the wrapper.
    x_flat = xp.reshape(B, C, hw_pad).astype(compute_dtype)

    # ---- query padding / N tiling (lane axis of the output) ----------------------------
    assert tile_n % 128 == 0, "tile_n must be a multiple of 128 (lane-dense output)"
    tn = min(tile_n, _round_up(N, 128))
    n_pad = _round_up(N, tn)
    num_n = n_pad // tn
    # positions stay float32 regardless of feature dtype; transposed so coords are lane-dense
    pos_t = jnp.transpose(pos.astype(jnp.float32), (0, 2, 1))      # [B, 2, N]
    if n_pad != N:
        pos_t = jnp.pad(pos_t, ((0, 0), (0, 0), (0, n_pad - N)))   # padded queries sliced off

    kernel = _make_kernel(tile_rows, fw_pad, float(fh), float(fw), float(H), float(W))

    flops = 2 * B * C * hw_pad * n_pad
    bytes_accessed = (num_n * x_flat.size * x_flat.dtype.itemsize   # x re-streamed per N tile
                      + pos_t.size * 4
                      + B * C * n_pad * jnp.dtype(out_dtype).itemsize)

    out_t = pl.pallas_call(
        kernel,
        out_shape=jax.ShapeDtypeStruct((B, C, n_pad), out_dtype),
        grid_spec=pltpu.PrefetchScalarGridSpec(
            num_scalar_prefetch=0,
            grid=(B, num_n, num_k),                 # reduction (HW) axis innermost
            in_specs=[
                pl.BlockSpec((None, 2, tn), lambda b, n, k: (b, 0, n)),    # pos^T tile
                pl.BlockSpec((None, C, tk), lambda b, n, k: (b, 0, k)),    # x tile
            ],
            out_specs=pl.BlockSpec((None, C, tn), lambda b, n, k: (b, 0, n)),
            scratch_shapes=[pltpu.VMEM((C, tn), jnp.float32)],             # f32 accumulator
        ),
        compiler_params=pltpu.CompilerParams(
            dimension_semantics=("parallel", "parallel", "arbitrary"),
            vmem_limit_bytes=32 * 1024 * 1024,
        ),
        cost_estimate=pl.CostEstimate(
            flops=int(flops), transcendentals=0, bytes_accessed=int(bytes_accessed)),
    )(pos_t, x_flat)

    # [B, C, N_pad] -> [B, N, C]
    return jnp.transpose(out_t, (0, 2, 1))[:, :N, :]


def _reference(x, pos, H, W):
    """Pure-JAX reference (dense bicubic formulation, f32) for a sanity check."""
    B, C, fh, fw = x.shape
    gx = 2.0 * pos[..., 0] / (W - 1.0) - 1.0
    gy = 2.0 * pos[..., 1] / (H - 1.0) - 1.0
    ix = ((gx + 1.0) * fw - 1.0) * 0.5          # [B, N]
    iy = ((gy + 1.0) * fh - 1.0) * 0.5
    hh = jnp.arange(fh, dtype=jnp.float32)
    ww = jnp.arange(fw, dtype=jnp.float32)
    wy = _cubic_weight(jnp.abs(hh[None, None, :] - iy[..., None]))   # [B, N, fh]
    wx = _cubic_weight(jnp.abs(ww[None, None, :] - ix[..., None]))   # [B, N, fw]
    wmat = wy[..., :, None] * wx[..., None, :]                       # [B, N, fh, fw]
    return jnp.einsum('bnhw,bchw->bnc', wmat, x)


if __name__ == "__main__":
    B, C, H, W, N = 2, 4, 16, 16, 8
    key = jax.random.PRNGKey(0)
    kx, kp = jax.random.split(key)
    x = jax.random.normal(kx, (B, C, H, W), dtype=jnp.float32)
    pos = jax.random.uniform(kp, (B, N, 2), dtype=jnp.float32,
                             minval=0.0, maxval=float(W - 1))

    ref = _reference(x, pos, H, W)

    # exact path: f32 MXU operands (tight tolerance proves the math is faithful)
    out_f32 = jax.block_until_ready(
        interpolate_sparse2d(x, pos, H, W, compute_dtype=jnp.float32))
    assert out_f32.shape == (B, N, C), out_f32.shape
    assert jnp.allclose(out_f32, ref, atol=1e-4, rtol=1e-4), "f32 mismatch vs reference"

    # production path: bf16 MXU operands, f32 accumulation (v6e/v7x MXU peak)
    out_bf16 = jax.block_until_ready(interpolate_sparse2d(x, pos, H, W))
    assert out_bf16.shape == (B, N, C), out_bf16.shape
    assert jnp.allclose(out_bf16, ref, atol=8e-2, rtol=8e-2), "bf16 mismatch vs reference"

    print("KERNEL_OK")
</pallas_src>

<mosaic_0001>
module attributes {stable_mosaic.version = 11 : i64} {
  func.func @kernel(%arg0: i32, %arg1: i32, %arg2: i32, %arg3: memref<1x2x128xf32, #tpu.memory_space<vmem>>, %arg4: memref<1x4x256xf32, #tpu.memory_space<vmem>>, %arg5: memref<1x4x128xf32, #tpu.memory_space<vmem>>, %arg6: memref<4x128xf32, #tpu.memory_space<vmem>>) attributes {dimension_semantics = [#tpu.dimension_semantics<parallel>, #tpu.dimension_semantics<parallel>, #tpu.dimension_semantics<arbitrary>], iteration_bounds = array<i64: 2, 1, 1>, scalar_prefetch = 0 : i64, scratch_operands = 1 : i64, tpu.core_type = #tpu.core_type<tc>, window_params = [{transform_indices = @transform_0, window_bounds = array<i64: 1, 2, 128>}, {transform_indices = @transform_1, window_bounds = array<i64: 1, 4, 256>}, {transform_indices = @transform_2, window_bounds = array<i64: 1, 4, 128>}]} {
    %c0_i32 = arith.constant 0 : i32
    %0 = arith.cmpi eq, %arg2, %c0_i32 : i32
    %1 = arith.extui %0 : i1 to i32
    %c0_i32_0 = arith.constant 0 : i32
    %2 = arith.cmpi ne, %1, %c0_i32_0 : i32
    scf.if %2 {
      %cst_46 = arith.constant 0.000000e+00 : f32
      %115 = vector.broadcast %cst_46 : f32 to vector<4x128xf32>
      %c0_47 = arith.constant 0 : index
      %c0_48 = arith.constant 0 : index
      %116 = vector.load %arg6[%c0_47, %c0_48] : memref<4x128xf32, #tpu.memory_space<vmem>>, vector<4x128xf32>
      tpu.vector_store %arg6[%c0_47, %c0_48], %115 {strides = array<i32>} : memref<4x128xf32, #tpu.memory_space<vmem>>, vector<4x128xf32>,
    } else {
    }
    %c0 = arith.constant 0 : index
    %c0_1 = arith.constant 0 : index
    %c0_2 = arith.constant 0 : index
    %3 = vector.load %arg3[%c0, %c0_1, %c0_2] : memref<1x2x128xf32, #tpu.memory_space<vmem>>, vector<1x2x128xf32>
    %4 = vector.shape_cast %3 : vector<1x2x128xf32> to vector<2x128xf32>
    %5 = vector.extract_strided_slice %4 {offsets = [0, 0], sizes = [1, 128], strides = [1, 1]} : vector<2x128xf32> to vector<1x128xf32>
    %6 = vector.extract_strided_slice %4 {offsets = [1, 0], sizes = [1, 128], strides = [1, 1]} : vector<2x128xf32> to vector<1x128xf32>
    %cst = arith.constant 2.000000e+00 : f32
    %7 = vector.broadcast %cst : f32 to vector<1x128xf32>
    %8 = arith.mulf %7, %5 : vector<1x128xf32>
    %cst_3 = arith.constant 1.500000e+01 : f32
    %9 = vector.broadcast %cst_3 : f32 to vector<1x128xf32>
    %10 = arith.divf %8, %9 : vector<1x128xf32>
    %cst_4 = arith.constant 1.000000e+00 : f32
    %11 = vector.broadcast %cst_4 : f32 to vector<1x128xf32>
    %12 = arith.subf %10, %11 : vector<1x128xf32>
    %cst_5 = arith.constant 2.000000e+00 : f32
    %13 = vector.broadcast %cst_5 : f32 to vector<1x128xf32>
    %14 = arith.mulf %13, %6 : vector<1x128xf32>
    %cst_6 = arith.constant 1.500000e+01 : f32
    %15 = vector.broadcast %cst_6 : f32 to vector<1x128xf32>
    %16 = arith.divf %14, %15 : vector<1x128xf32>
    %cst_7 = arith.constant 1.000000e+00 : f32
    %17 = vector.broadcast %cst_7 : f32 to vector<1x128xf32>
    %18 = arith.subf %16, %17 : vector<1x128xf32>
    %cst_8 = arith.constant 1.000000e+00 : f32
    %19 = vector.broadcast %cst_8 : f32 to vector<1x128xf32>
    %20 = arith.addf %12, %19 : vector<1x128xf32>
    %cst_9 = arith.constant 1.600000e+01 : f32
    %21 = vector.broadcast %cst_9 : f32 to vector<1x128xf32>
    %22 = arith.mulf %20, %21 : vector<1x128xf32>
    %cst_10 = arith.constant 1.000000e+00 : f32
    %23 = vector.broadcast %cst_10 : f32 to vector<1x128xf32>
    %24 = arith.subf %22, %23 : vector<1x128xf32>
    %cst_11 = arith.constant 5.000000e-01 : f32
    %25 = vector.broadcast %cst_11 : f32 to vector<1x128xf32>
    %26 = arith.mulf %24, %25 : vector<1x128xf32>
    %cst_12 = arith.constant 1.000000e+00 : f32
    %27 = vector.broadcast %cst_12 : f32 to vector<1x128xf32>
    %28 = arith.addf %18, %27 : vector<1x128xf32>
    %cst_13 = arith.constant 1.600000e+01 : f32
    %29 = vector.broadcast %cst_13 : f32 to vector<1x128xf32>
    %30 = arith.mulf %28, %29 : vector<1x128xf32>
    %cst_14 = arith.constant 1.000000e+00 : f32
    %31 = vector.broadcast %cst_14 : f32 to vector<1x128xf32>
    %32 = arith.subf %30, %31 : vector<1x128xf32>
    %cst_15 = arith.constant 5.000000e-01 : f32
    %33 = vector.broadcast %cst_15 : f32 to vector<1x128xf32>
    %34 = arith.mulf %32, %33 : vector<1x128xf32>
    %35 = tpu.iota {dimensions = array<i32: 0>} : vector<16x128xi32>
    %c16_i32 = arith.constant 16 : i32
    %36 = arith.muli %arg2, %c16_i32 : i32
    %37 = vector.broadcast %36 : i32 to vector<16x128xi32>
    %38 = arith.addi %35, %37 : vector<16x128xi32>
    %39 = arith.sitofp %38 : vector<16x128xi32> to vector<16x128xf32>
    %40 = tpu.iota {dimensions = array<i32: 0>} : vector<16x128xi32>
    %41 = arith.sitofp %40 : vector<16x128xi32> to vector<16x128xf32>
    %42 = vector.broadcast %34 : vector<1x128xf32> to vector<16x128xf32>
    %43 = arith.subf %39, %42 : vector<16x128xf32>
    %44 = math.absf %43 : vector<16x128xf32>
    %45 = arith.mulf %44, %44 : vector<16x128xf32>
    %46 = arith.mulf %45, %44 : vector<16x128xf32>
    %cst_16 = arith.constant 1.250000e+00 : f32
    %47 = vector.broadcast %cst_16 : f32 to vector<16x128xf32>
    %48 = arith.mulf %47, %46 : vector<16x128xf32>
    %cst_17 = arith.constant 2.250000e+00 : f32
    %49 = vector.broadcast %cst_17 : f32 to vector<16x128xf32>
    %50 = arith.mulf %49, %45 : vector<16x128xf32>
    %51 = arith.subf %48, %50 : vector<16x128xf32>
    %cst_18 = arith.constant 1.000000e+00 : f32
    %52 = vector.broadcast %cst_18 : f32 to vector<16x128xf32>
    %53 = arith.addf %51, %52 : vector<16x128xf32>
    %cst_19 = arith.constant -7.500000e-01 : f32
    %54 = vector.broadcast %cst_19 : f32 to vector<16x128xf32>
    %55 = arith.mulf %54, %46 : vector<16x128xf32>
    %cst_20 = arith.constant -3.750000e+00 : f32
    %56 = vector.broadcast %cst_20 : f32 to vector<16x128xf32>
    %57 = arith.mulf %56, %45 : vector<16x128xf32>
    %58 = arith.subf %55, %57 : vector<16x128xf32>
    %cst_21 = arith.constant -6.000000e+00 : f32
    %59 = vector.broadcast %cst_21 : f32 to vector<16x128xf32>
    %60 = arith.mulf %59, %44 : vector<16x128xf32>
    %61 = arith.addf %58, %60 : vector<16x128xf32>
    %cst_22 = arith.constant -3.000000e+00 : f32
    %62 = vector.broadcast %cst_22 : f32 to vector<16x128xf32>
    %63 = arith.subf %61, %62 : vector<16x128xf32>
    %cst_23 = arith.constant 1.000000e+00 : f32
    %64 = vector.broadcast %cst_23 : f32 to vector<16x128xf32>
    %65 = arith.cmpf ole, %44, %64 : vector<16x128xf32>
    %cst_24 = arith.constant 2.000000e+00 : f32
    %66 = vector.broadcast %cst_24 : f32 to vector<16x128xf32>
    %67 = arith.cmpf olt, %44, %66 : vector<16x128xf32>
    %cst_25 = arith.constant 0.000000e+00 : f32
    %68 = vector.broadcast %cst_25 : f32 to vector<16x128xf32>
    %69 = arith.select %67, %63, %68 : vector<16x128xi1>, vector<16x128xf32>
    %70 = arith.select %65, %53, %69 : vector<16x128xi1>, vector<16x128xf32>
    %71 = vector.broadcast %26 : vector<1x128xf32> to vector<16x128xf32>
    %72 = arith.subf %41, %71 : vector<16x128xf32>
    %73 = math.absf %72 : vector<16x128xf32>
    %74 = arith.mulf %73, %73 : vector<16x128xf32>
    %75 = arith.mulf %74, %73 : vector<16x128xf32>
    %cst_26 = arith.constant 1.250000e+00 : f32
    %76 = vector.broadcast %cst_26 : f32 to vector<16x128xf32>
    %77 = arith.mulf %76, %75 : vector<16x128xf32>
    %cst_27 = arith.constant 2.250000e+00 : f32
    %78 = vector.broadcast %cst_27 : f32 to vector<16x128xf32>
    %79 = arith.mulf %78, %74 : vector<16x128xf32>
    %80 = arith.subf %77, %79 : vector<16x128xf32>
    %cst_28 = arith.constant 1.000000e+00 : f32
    %81 = vector.broadcast %cst_28 : f32 to vector<16x128xf32>
    %82 = arith.addf %80, %81 : vector<16x128xf32>
    %cst_29 = arith.constant -7.500000e-01 : f32
    %83 = vector.broadcast %cst_29 : f32 to vector<16x128xf32>
    %84 = arith.mulf %83, %75 : vector<16x128xf32>
    %cst_30 = arith.constant -3.750000e+00 : f32
    %85 = vector.broadcast %cst_30 : f32 to vector<16x128xf32>
    %86 = arith.mulf %85, %74 : vector<16x128xf32>
    %87 = arith.subf %84, %86 : vector<16x128xf32>
    %cst_31 = arith.constant -6.000000e+00 : f32
    %88 = vector.broadcast %cst_31 : f32 to vector<16x128xf32>
    %89 = arith.mulf %88, %73 : vector<16x128xf32>
    %90 = arith.addf %87, %89 : vector<16x128xf32>
    %cst_32 = arith.constant -3.000000e+00 : f32
    %91 = vector.broadcast %cst_32 : f32 to vector<16x128xf32>
    %92 = arith.subf %90, %91 : vector<16x128xf32>
    %cst_33 = arith.constant 1.000000e+00 : f32
    %93 = vector.broadcast %cst_33 : f32 to vector<16x128xf32>
    %94 = arith.cmpf ole, %73, %93 : vector<16x128xf32>
    %cst_34 = arith.constant 2.000000e+00 : f32
    %95 = vector.broadcast %cst_34 : f32 to vector<16x128xf32>
    %96 = arith.cmpf olt, %73, %95 : vector<16x128xf32>
    %cst_35 = arith.constant 0.000000e+00 : f32
    %97 = vector.broadcast %cst_35 : f32 to vector<16x128xf32>
    %98 = arith.select %96, %92, %97 : vector<16x128xi1>, vector<16x128xf32>
    %99 = arith.select %94, %82, %98 : vector<16x128xi1>, vector<16x128xf32>
    %100 = vector.shape_cast %70 : vector<16x128xf32> to vector<16x1x128xf32>
    %101 = vector.shape_cast %99 : vector<16x128xf32> to vector<1x16x128xf32>
    %102 = vector.broadcast %100 : vector<16x1x128xf32> to vector<16x16x128xf32>
    %103 = vector.broadcast %101 : vector<1x16x128xf32> to vector<16x16x128xf32>
    %104 = arith.mulf %102, %103 : vector<16x16x128xf32>
    %105 = vector.shape_cast %104 : vector<16x16x128xf32> to vector<256x128xf32>
    %c0_36 = arith.constant 0 : index
    %c0_37 = arith.constant 0 : index
    %106 = vector.load %arg6[%c0_36, %c0_37] : memref<4x128xf32, #tpu.memory_space<vmem>>, vector<4x128xf32>
    %c0_38 = arith.constant 0 : index
    %c0_39 = arith.constant 0 : index
    %c0_40 = arith.constant 0 : index
    %107 = vector.load %arg4[%c0_38, %c0_39, %c0_40] : memref<1x4x256xf32, #tpu.memory_space<vmem>>, vector<1x4x256xf32>
    %108 = vector.shape_cast %107 : vector<1x4x256xf32> to vector<4x256xf32>
    %cst_41 = arith.constant dense<0.000000e+00> : vector<4x128xf32>
    %109 = tpu.matmul %108, %105, %cst_41 {dimension_numbers = #tpu.dot_dimension_numbers<[1], [0], [0], [1], [0, 0, 1, 1], [], []>} : vector<4x256xf32>, vector<256x128xf32>, vector<4x128xf32> -> vector<4x128xf32>
    %110 = arith.addf %106, %109 : vector<4x128xf32>
    %c0_42 = arith.constant 0 : index
    %c0_43 = arith.constant 0 : index
    %111 = vector.load %arg6[%c0_42, %c0_43] : memref<4x128xf32, #tpu.memory_space<vmem>>, vector<4x128xf32>
    tpu.vector_store %arg6[%c0_42, %c0_43], %110 {strides = array<i32>} : memref<4x128xf32, #tpu.memory_space<vmem>>, vector<4x128xf32>,
    %c0_i32_44 = arith.constant 0 : i32
    %112 = arith.cmpi eq, %arg2, %c0_i32_44 : i32
    %113 = arith.extui %112 : i1 to i32
    %c0_i32_45 = arith.constant 0 : i32
    %114 = arith.cmpi ne, %113, %c0_i32_45 : i32
    scf.if %114 {
      %c0_46 = arith.constant 0 : index
      %c0_47 = arith.constant 0 : index
      %115 = vector.load %arg6[%c0_46, %c0_47] : memref<4x128xf32, #tpu.memory_space<vmem>>, vector<4x128xf32>
      %c0_48 = arith.constant 0 : index
      %c0_49 = arith.constant 0 : index
      %c0_50 = arith.constant 0 : index
      %116 = vector.load %arg5[%c0_48, %c0_49, %c0_50] : memref<1x4x128xf32, #tpu.memory_space<vmem>>, vector<1x4x128xf32>
      %117 = vector.shape_cast %116 : vector<1x4x128xf32> to vector<4x128xf32>
      %118 = vector.shape_cast %115 : vector<4x128xf32> to vector<1x4x128xf32>
      tpu.vector_store %arg5[%c0_48, %c0_49, %c0_50], %118 {strides = array<i32>} : memref<1x4x128xf32, #tpu.memory_space<vmem>>, vector<1x4x128xf32>,
    } else {
    }
    return
  }
  func.func @transform_0(%arg0: i32, %arg1: i32, %arg2: i32) -> (i32, i32, i32) {
    %c0_i32 = arith.constant 0 : i32
    %c0_i32_0 = arith.constant 0 : i32
    return %arg0, %c0_i32, %arg1 : i32, i32, i32
  }
  func.func @transform_1(%arg0: i32, %arg1: i32, %arg2: i32) -> (i32, i32, i32) {
    %c0_i32 = arith.constant 0 : i32
    %c0_i32_0 = arith.constant 0 : i32
    return %arg0, %c0_i32, %arg2 : i32, i32, i32
  }
  func.func @transform_2(%arg0: i32, %arg1: i32, %arg2: i32) -> (i32, i32, i32) {
    %c0_i32 = arith.constant 0 : i32
    %c0_i32_0 = arith.constant 0 : i32
    return %arg0, %c0_i32, %arg1 : i32, i32, i32
  }
}

</mosaic_0001>

<llo_original>
// kernel: tpu_custom_call.1
$region0: #{tpu_custom_call.1}
  #allocation0 [shape = 'u32[]', space=smem, size = 0x4, offset = 0x4, fixed_abs, tag = 'smem constant byte address 0x4 - core index']
  #allocation1 [shape = 'u32[144,128]{1,0:T(1,128)}', space=vmem, size = 0x12000, scoped, tag = 'internal scratch']
  #allocation2 [shape = 'f32[4,128]{1,0:T(4,128)}', space=vmem, size = 0x800, scoped, tag = 'scratch operand']
  %s0 = inlined_call_operand.hbm [shape: f32[2,2,128], index: 0, kind: input, shape index: {}]
  %s1 = inlined_call_operand.hbm [shape: f32[2,4,256], index: 1, kind: input, shape index: {}]
  %s2 = inlined_call_operand.hbm [shape: f32[2,4,128], index: 2, kind: output, shape index: {}]
  %s3 = sld [smem:[#allocation0]]
  $region57: #{tpu_custom_call.1} parent=0
    _
  %s5 = ssub.s32 1, %s3
  %s6 = scalar_select 0, %s5, %s3
  $region1: #{tpu_custom_call.1} parent=0
    #allocation3 [shape = 'u8[2048]{0}', space=vmem, size = 0x800, scoped, tag = 'input window, operand 0']
    #allocation4 [shape = 's32[2]{0}', space=sflag, size = 0x8, scoped, tag = 'scoped memory for tpu_custom_call.1']
    #allocation5 [shape = 's32[2]{0}', space=sflag, size = 0x8, scoped, tag = 'scoped memory for tpu_custom_call.1']
    #allocation6 [shape = 'u8[8192]{0}', space=vmem, size = 0x2000, scoped, tag = 'input window, operand 1']
    #allocation7 [shape = 's32[2]{0}', space=sflag, size = 0x8, scoped, tag = 'scoped memory for tpu_custom_call.1']
    #allocation8 [shape = 'u8[4096]{0}', space=vmem, size = 0x1000, scoped, tag = 'output window, operand 0']
    %7 = vsyncpa [#allocation4], 0
    %s8 = scalar_lea.sflag [#allocation4], 1
    %9 = vsyncpa %s8, 0
    %10 = vsyncpa [#allocation7], 0
    %s11 = scalar_lea.sflag [#allocation7], 1
    %12 = vsyncpa %s11, 0
    %13 = vsyncpa [#allocation5], 0
    %s14 = scalar_lea.sflag [#allocation5], 1
    %15 = vsyncpa %s14, 0
    loop: start=0, step=1, limit=4
    $region2: #{tpu_custom_call.1} parent=1 // loop_pre_header
      _
    $region3: #{tpu_custom_call.1} parent=1 // loop_header
      %s17 = sphi 0, %s21
      %p18 = scmp.ge.s32.totalorder %s17, 4
      %s24 = sphi 0, %s43
      %s25 = sphi 0, %s39
      %s26 = sphi 0, %s35
      %s27 = sphi 0, %s24
      %s28 = sphi 0, %s25
      %s29 = sphi 0, %s26
      %s30 = sphi 0, %s27
      %s31 = sphi 0, %s28
      %s32 = sphi 0, %s29
      %s48 = sphi 0, %s50
      %s51 = sphi 0, %s48
      %s52 = sphi 0, %s51
      %s68 = sphi 0, %s52
      %s76 = sphi 0, %s78
      %s79 = sphi 0, %s76
      %s80 = sphi 0, %s79
      %s96 = sphi 0, %s80
      %s104 = sphi 0, %s106
      %s107 = sphi 0, %s104
      %s108 = sphi 0, %s107
      %s124 = sphi 0, %s108
    $region4: #{tpu_custom_call.1} parent=1 // loop_header_branch
      %20 = sbr.rel (%p18) target = $region8
    $region5: #{tpu_custom_call.1} parent=1 // loop_body
      %s22 = ssub.s32 %s17, 1
      %s23 = ssub.s32 %s17, 2
      %s33 = sadd.s32 1, %s26
      %p34 = scmp.ge.s32.totalorder %s33, 1
      %s35 = scalar_select %p34, 0, %s33
      %s36 = sadd.s32 1, %s25
      %s37 = scalar_select %p34, %s36, %s25
      %p38 = scmp.ge.s32.totalorder %s37, 1
      %s39 = scalar_select %p38, 0, %s37
      %s40 = sadd.s32 1, %s24
      %s41 = scalar_select %p38, %s40, %s24
      %p42 = scmp.ge.s32.totalorder %s41, 2
      %s43 = scalar_select %p42, 0, %s41
      %s44 = ssub.s32 %s24, %s43
      %s45 = ssub.s32 %s25, %s39
      %s46 = sor.u32 %s44, %s45
      %p47 = scmp.eq.s32.totalorder %s46, 0
      %s49 = sadd.s32 %s48, 1
      %s50 = scalar_select %p47, %s48, %s49
      %p53 = pneg %p47
      %p54 = scmp.eq.s32.totalorder %s17, 1
      %p55 = por %p53, %p54
      %p56 = scmp.ne.s32.totalorder %s48, %s51
      %p57 = scmp.eq.s32.totalorder %s17, 0
      %p58 = por %p56, %p57
      %p59 = scmp.ne.s32.totalorder %s48, %s51
      %p60 = scmp.eq.s32.totalorder %s22, 1
      %p61 = por %p59, %p60
      %p62 = scmp.ne.s32.totalorder %s51, %s52
      %p63 = scmp.eq.s32.totalorder %s22, 0
      %p64 = por %p62, %p63
      %p65 = scmp.ne.s32.totalorder %s51, %s52
      %p66 = scmp.eq.s32.totalorder %s23, 1
      %p67 = por %p65, %p66
      %p69 = scmp.ne.s32.totalorder %s52, %s68
      %p70 = scmp.eq.s32.totalorder %s23, 0
      %p71 = por %p69, %p70
      %s72 = ssub.s32 %s24, %s43
      %s73 = ssub.s32 %s26, %s35
      %s74 = sor.u32 %s72, %s73
      %p75 = scmp.eq.s32.totalorder %s74, 0
      %s77 = sadd.s32 %s76, 1
      %s78 = scalar_select %p75, %s76, %s77
      %p81 = pneg %p75
      %p82 = scmp.eq.s32.totalorder %s17, 1
      %p83 = por %p81, %p82
      %p84 = scmp.ne.s32.totalorder %s76, %s79
      %p85 = scmp.eq.s32.totalorder %s17, 0
      %p86 = por %p84, %p85
      %p87 = scmp.ne.s32.totalorder %s76, %s79
      %p88 = scmp.eq.s32.totalorder %s22, 1
      %p89 = por %p87, %p88
      %p90 = scmp.ne.s32.totalorder %s79, %s80
      %p91 = scmp.eq.s32.totalorder %s22, 0
      %p92 = por %p90, %p91
      %p93 = scmp.ne.s32.totalorder %s79, %s80
      %p94 = scmp.eq.s32.totalorder %s23, 1
      %p95 = por %p93, %p94
      %p97 = scmp.ne.s32.totalorder %s80, %s96
      %p98 = scmp.eq.s32.totalorder %s23, 0
      %p99 = por %p97, %p98
      %s100 = ssub.s32 %s24, %s43
      %s101 = ssub.s32 %s25, %s39
      %s102 = sor.u32 %s100, %s101
      %p103 = scmp.eq.s32.totalorder %s102, 0
      %s105 = sadd.s32 %s104, 1
      %s106 = scalar_select %p103, %s104, %s105
      %p109 = pneg %p103
      %p110 = scmp.eq.s32.totalorder %s17, 1
      %p111 = por %p109, %p110
      %p112 = scmp.ne.s32.totalorder %s104, %s107
      %p113 = scmp.eq.s32.totalorder %s17, 0
      %p114 = por %p112, %p113
      %p115 = scmp.ne.s32.totalorder %s104, %s107
      %p116 = scmp.eq.s32.totalorder %s22, 1
      %p117 = por %p115, %p116
      %p118 = scmp.ne.s32.totalorder %s107, %s108
      %p119 = scmp.eq.s32.totalorder %s22, 0
      %p120 = por %p118, %p119
      %p121 = scmp.ne.s32.totalorder %s107, %s108
      %p122 = scmp.eq.s32.totalorder %s23, 1
      %p123 = por %p121, %p122
      %p125 = scmp.ne.s32.totalorder %s108, %s124
      %p126 = scmp.eq.s32.totalorder %s23, 0
      %p127 = por %p125, %p126
      %p128 = scmp.le.s32.totalorder 1, %s17
      %p129 = scmp.lt.s32.totalorder %s17, 3
      %p130 = pnand %p128, %p129
      %p131 = pneg %p130
      // Predicated region
      $region9: #{tpu_custom_call.1} parent=5 // pred_check
        _
      $region10: #{tpu_custom_call.1} parent=5 // pred_check_branch
        %133 = sbr.rel (%p130) target = $region12
      $region11: #{tpu_custom_call.1} parent=5 // pred_region
        %s134 = ssub.s32 %s17, 1
      $region12: #{tpu_custom_call.1} parent=5 // pred_fallthru
        _
      %p135 = scmp.lt.s32.totalorder %s17, 2
      // Predicated region
      $region13: #{tpu_custom_call.1} parent=5 // pred_check
        %p136 = pneg %p135
      $region14: #{tpu_custom_call.1} parent=5 // pred_check_branch
        %138 = sbr.rel (%p136) target = $region16
      $region15: #{tpu_custom_call.1} parent=5 // pred_region
        // Predicated region
        $region17: #{tpu_custom_call.1} parent=15 // pred_check
          %p139 = pneg %p58
        $region18: #{tpu_custom_call.1} parent=15 // pred_check_branch
          %141 = sbr.rel (%p139) target = $region20
        $region19: #{tpu_custom_call.1} parent=15 // pred_region
          %s142 = sand.u32 %s48, 1
          %s143 = scalar_lea.sflag [#allocation4], %s142
          %s144 = sand.u32 %s48, 1
          %s145 = smul.addr %s144, 2
          %s146 = scalar_lea.vmem [#allocation3], %s145
          %s148 = ssub.s32 32, 32
          %149 = vsyncadd %s143, %s148
          %s150 = sadd.s32 %s25, %s24
          %s151 = smul.addr %s150, 32
          %s152 = scalar_lea.hbm %s0, %s151
          %s154 = sshll.u32 %s146, 4
          %s155 = int_to_ptr.vmem [resolvable:$true] %s154
          %157 = dma.hbm_to_vmem [thread:$0]  %s152, 32, %s155, %s143
        $region20: #{tpu_custom_call.1} parent=15 // pred_fallthru
          _
        // Predicated region
        $region21: #{tpu_custom_call.1} parent=15 // pred_check
          %p158 = pneg %p86
        $region22: #{tpu_custom_call.1} parent=15 // pred_check_branch
          %160 = sbr.rel (%p158) target = $region24
        $region23: #{tpu_custom_call.1} parent=15 // pred_region
          %s161 = sand.u32 %s76, 1
          %s162 = scalar_lea.sflag [#allocation7], %s161
          %s163 = sand.u32 %s76, 1
          %s164 = smul.addr %s163, 8
          %s165 = scalar_lea.vmem [#allocation6], %s164
          %s166 = smul.u32 2, %s26
          %s168 = ssub.s32 128, 128
          %169 = vsyncadd %s162, %s168
          %s170 = smul.addr %s24, 2
          %s171 = sadd.s32 %s166, %s170
          %s172 = smul.addr %s171, 64
          %s173 = scalar_lea.hbm %s1, %s172
          %s175 = sshll.u32 %s165, 4
          %s176 = int_to_ptr.vmem [resolvable:$true] %s175
          %178 = dma.hbm_to_vmem [thread:$0]  %s173, 128, %s176, %s162
        $region24: #{tpu_custom_call.1} parent=15 // pred_fallthru
          _
      $region16: #{tpu_custom_call.1} parent=5 // pred_fallthru
        _
      %p179 = scmp.le.s32.totalorder 1, %s17
      %p180 = scmp.lt.s32.totalorder %s17, 3
      %p181 = pnand %p179, %p180
      %p182 = pneg %p181
      // Predicated region
      $region25: #{tpu_custom_call.1} parent=5 // pred_check
        _
      $region26: #{tpu_custom_call.1} parent=5 // pred_check_branch
        %184 = sbr.rel (%p181) target = $region28
      $region27: #{tpu_custom_call.1} parent=5 // pred_region
        %s185 = ssub.s32 %s17, 1
        %s186 = sand.u32 %s51, 1
        %s187 = scalar_lea.sflag [#allocation4], %s186
        %s188 = sand.u32 %s51, 1
        %s189 = smul.addr %s188, 2
        %s190 = scalar_lea.vmem [#allocation3], %s189
        // Predicated region
        $region29: #{tpu_custom_call.1} parent=27 // pred_check
          %p191 = pneg %p64
        $region30: #{tpu_custom_call.1} parent=27 // pred_check_branch
          %193 = sbr.rel (%p191) target = $region32
        $region31: #{tpu_custom_call.1} parent=27 // pred_region
          %194 = dma.done %s187, 32
        $region32: #{tpu_custom_call.1} parent=27 // pred_fallthru
          _
        %s195 = sand.u32 %s79, 1
        %s196 = scalar_lea.sflag [#allocation7], %s195
        %s197 = sand.u32 %s79, 1
        %s198 = smul.addr %s197, 8
        %s199 = scalar_lea.vmem [#allocation6], %s198
        // Predicated region
        $region33: #{tpu_custom_call.1} parent=27 // pred_check
          %p200 = pneg %p92
        $region34: #{tpu_custom_call.1} parent=27 // pred_check_branch
          %202 = sbr.rel (%p200) target = $region36
        $region35: #{tpu_custom_call.1} parent=27 // pred_region
          %203 = dma.done %s196, 128
        $region36: #{tpu_custom_call.1} parent=27 // pred_fallthru
          _
        %s204 = sand.u32 %s51, 1
        %s205 = scalar_lea.sflag [#allocation4], %s204
        %s206 = sand.u32 %s51, 1
        %s207 = smul.addr %s206, 2
        %s208 = scalar_lea.vmem [#allocation3], %s207
        %p209 = pneg %p64
        %p210 = pneg %p61
        %s211 = sand.u32 %s79, 1
        %s212 = scalar_lea.sflag [#allocation7], %s211
        %s213 = sand.u32 %s79, 1
        %s214 = smul.addr %s213, 8
        %s215 = scalar_lea.vmem [#allocation6], %s214
        %p216 = pneg %p92
        %p217 = pneg %p89
        %p218 = pneg %p120
        %p219 = pneg %p117
        %s220 = sand.u32 %s107, 1
        %s221 = scalar_lea.sflag [#allocation5], %s220
        %s222 = sand.u32 %s107, 1
        %s223 = smul.addr %s222, 4
        %s224 = scalar_lea.vmem [#allocation8], %s223
        %s225 = smul.u32 2, %s29
        %p226 = scmp.eq.s32.totalorder %s29, 0
        // Predicated region
        $region37: #{tpu_custom_call.1} parent=27 // pred_check
          %p227 = pneg %p226
        $region38: #{tpu_custom_call.1} parent=27 // pred_check_branch
          %229 = sbr.rel (%p227) target = $region40
        $region39: #{tpu_custom_call.1} parent=27 // pred_region
          %230 = vst [vmem:[#allocation2] sm:$0xf] 0.0
        $region40: #{tpu_custom_call.1} parent=27 // pred_fallthru
          _
        %v231 = vld [vmem:[%s190] sm:$0x3]
        %v232 = vmul.f32 %v231, 2.0
        %v233 = vrcp.pop 15.0
        %v234 = vmul.f32 %v232, %v233
        %v235 = vsub.f32 %v234, 1.0
        %v236 = vadd.f32 %v235, 1.0
        %v237 = vmul.f32 %v236, 16.0
        %v238 = vsub.f32 %v237, 1.0
        %v239 = vmul.f32 %v238, 0.5
        %v240 = vlaneseq
        %v241 = vshrl.u32 %v240, 7
        %v242 = vadd.s32 %v241, 8
        %s243 = smul.u32 %s29, 16
        %v244 = vstv %s243
        %v245 = vadd.s32 %v241, %v244
        %v246 = vadd.s32 %v242, %v244
        %v247 = vcvt.s32.f32 %v245
        %v248 = vcvt.s32.f32 %v246
        %v249 = vcvt.s32.f32 %v241
        %v250 = vcvt.s32.f32 %v242
        %v251 = vlaneseq
        %v252 = vshrl.u32 %v251, 7
        %v253 = vsub.s32 1, %v252
        %v254 = vrot.slane %v239, %v253
        %v255 = vsub.f32 %v247, %v254
        %v256 = vsub.f32 %v248, %v254
        %v257 = vand.u32 2147483647, %v255
        %v258 = vand.u32 2147483647, %v256
        %v259 = vmul.f32 %v257, %v257
        %v260 = vmul.f32 %v258, %v258
        %v261 = vmul.f32 %v259, %v257
        %v262 = vmul.f32 %v260, %v258
        %v263 = vmul.f32 %v261, 1.25
        %v264 = vmul.f32 %v262, 1.25
        %v265 = vmul.f32 %v259, 2.25
        %v266 = vmul.f32 %v260, 2.25
        %v267 = vsub.f32 %v263, %v265
        %v268 = vsub.f32 %v264, %v266
        %v269 = vadd.f32 %v267, 1.0
        %v270 = vadd.f32 %v268, 1.0
        %v271 = vmul.f32 %v261, -0.75
        %v272 = vmul.f32 %v262, -0.75
        %v273 = vmul.f32 %v259, -3.75
        %v274 = vmul.f32 %v260, -3.75
        %v275 = vsub.f32 %v271, %v273
        %v276 = vsub.f32 %v272, %v274
        %v277 = vmul.f32 %v257, -6.0
        %v278 = vmul.f32 %v258, -6.0
        %v279 = vadd.f32 %v275, %v277
        %v280 = vadd.f32 %v276, %v278
        %v281 = vsub.f32 %v279, -3.0
        %v282 = vsub.f32 %v280, -3.0
        %vm283 = vcmp.le.f32.partialorder %v257, 1.0
        %vm284 = vcmp.le.f32.partialorder %v258, 1.0
        %vm285 = vcmp.lt.f32.partialorder %v257, 2.0
        %vm286 = vcmp.lt.f32.partialorder %v258, 2.0
        %v287 = vsel %vm285, %v281, 0.0
        %v288 = vsel %vm286, %v282, 0.0
        %v289 = vsel %vm283, %v269, %v287
        %v290 = vsel %vm284, %v270, %v288
        %v291 = vlaneseq
        %v292 = vshrl.u32 %v291, 7
        %v293 = vsub.s32 0, %v292
        %v294 = vrot.slane %v239, %v293
        %v295 = vsub.f32 %v249, %v294
        %v296 = vsub.f32 %v250, %v294
        %v297 = vand.u32 2147483647, %v295
        %v298 = vand.u32 2147483647, %v296
        %v299 = vmul.f32 %v297, %v297
        %v300 = vmul.f32 %v298, %v298
        %v301 = vmul.f32 %v299, %v297
        %v302 = vmul.f32 %v300, %v298
        %v303 = vmul.f32 %v301, 1.25
        %v304 = vmul.f32 %v302, 1.25
        %v305 = vmul.f32 %v299, 2.25
        %v306 = vmul.f32 %v300, 2.25
        %v307 = vsub.f32 %v303, %v305
        %v308 = vsub.f32 %v304, %v306
        %v309 = vadd.f32 %v307, 1.0
        %v310 = vadd.f32 %v308, 1.0
        %v311 = vmul.f32 %v301, -0.75
        %v312 = vmul.f32 %v302, -0.75
        %v313 = vmul.f32 %v299, -3.75
        %v314 = vmul.f32 %v300, -3.75
        %v315 = vsub.f32 %v311, %v313
        %v316 = vsub.f32 %v312, %v314
        %v317 = vmul.f32 %v297, -6.0
        %v318 = vmul.f32 %v298, -6.0
        %v319 = vadd.f32 %v315, %v317
        %v320 = vadd.f32 %v316, %v318
        %v321 = vsub.f32 %v319, -3.0
        %v322 = vsub.f32 %v320, -3.0
        %vm323 = vcmp.le.f32.partialorder %v297, 1.0
        %vm324 = vcmp.le.f32.partialorder %v298, 1.0
        %vm325 = vcmp.lt.f32.partialorder %v297, 2.0
        %vm326 = vcmp.lt.f32.partialorder %v298, 2.0
        %v327 = vsel %vm325, %v321, 0.0
        %v328 = vsel %vm326, %v322, 0.0
        %v329 = vsel %vm323, %v309, %v327
        %v330 = vsel %vm324, %v310, %v328
        %v333 = vcombine.high %v289, %v289
        %v335 = vunpack.c.l.s4 1966171168
        %v336 = vunpack.c.0.s8 %v335
        %v337 = vlaneseq
        %v338 = vshrl.u32 %v337, 7
        %v339 = vsub.s32 %v336, %v338
        %v340 = vrot.slane %v289, %v339
        %v342 = vunpack.c.l.s4 1966171168
        %v343 = vunpack.c.0.s8 %v342
        %v344 = vlaneseq
        %v345 = vshrl.u32 %v344, 7
        %v346 = vsub.s32 %v343, %v345
        %v347 = vrot.slane %v333, %v346
        %v348 = vcombine.high %v340, %v340
        %v349 = vcombine.high %v347, %v347
        %v351 = vunpack.c.l.s4 1966171168
        %v352 = vunpack.c.0.s8 %v351
        %v353 = vlaneseq
        %v354 = vshrl.u32 %v353, 7
        %v355 = vsub.s32 %v352, %v354
        %v356 = vrot.slane %v340, %v355
        %v358 = vunpack.c.l.s4 1966171168
        %v359 = vunpack.c.0.s8 %v358
        %v360 = vlaneseq
        %v361 = vshrl.u32 %v360, 7
        %v362 = vsub.s32 %v359, %v361
        %v363 = vrot.slane %v347, %v362
        %v365 = vunpack.c.l.s4 1966171168
        %v366 = vunpack.c.0.s8 %v365
        %v367 = vlaneseq
        %v368 = vshrl.u32 %v367, 7
        %v369 = vsub.s32 %v366, %v368
        %v370 = vrot.slane %v348, %v369
        %v372 = vunpack.c.l.s4 1966171168
        %v373 = vunpack.c.0.s8 %v372
        %v374 = vlaneseq
        %v375 = vshrl.u32 %v374, 7
        %v376 = vsub.s32 %v373, %v375
        %v377 = vrot.slane %v349, %v376
        %v378 = vcombine.high %v356, %v356
        %v379 = vcombine.high %v363, %v363
        %v380 = vcombine.high %v370, %v370
        %v381 = vcombine.high %v377, %v377
        %v382 = vcombine.high %v290, %v290
        %v384 = vunpack.c.l.s4 1966171168
        %v385 = vunpack.c.0.s8 %v384
        %v386 = vlaneseq
        %v387 = vshrl.u32 %v386, 7
        %v388 = vsub.s32 %v385, %v387
        %v389 = vrot.slane %v290, %v388
        %v391 = vunpack.c.l.s4 1966171168
        %v392 = vunpack.c.0.s8 %v391
        %v393 = vlaneseq
        %v394 = vshrl.u32 %v393, 7
        %v395 = vsub.s32 %v392, %v394
        %v396 = vrot.slane %v382, %v395
        %v397 = vcombine.high %v389, %v389
        %v398 = vcombine.high %v396, %v396
        %v400 = vunpack.c.l.s4 1966171168
        %v401 = vunpack.c.0.s8 %v400
        %v402 = vlaneseq
        %v403 = vshrl.u32 %v402, 7
        %v404 = vsub.s32 %v401, %v403
        %v405 = vrot.slane %v389, %v404
        %v407 = vunpack.c.l.s4 1966171168
        %v408 = vunpack.c.0.s8 %v407
        %v409 = vlaneseq
        %v410 = vshrl.u32 %v409, 7
        %v411 = vsub.s32 %v408, %v410
        %v412 = vrot.slane %v396, %v411
        %v414 = vunpack.c.l.s4 1966171168
        %v415 = vunpack.c.0.s8 %v414
        %v416 = vlaneseq
        %v417 = vshrl.u32 %v416, 7
        %v418 = vsub.s32 %v415, %v417
        %v419 = vrot.slane %v397, %v418
        %v421 = vunpack.c.l.s4 1966171168
        %v422 = vunpack.c.0.s8 %v421
        %v423 = vlaneseq
        %v424 = vshrl.u32 %v423, 7
        %v425 = vsub.s32 %v422, %v424
        %v426 = vrot.slane %v398, %v425
        %v427 = vcombine.high %v405, %v405
        %v428 = vcombine.high %v412, %v412
        %v429 = vcombine.high %v419, %v419
        %v430 = vcombine.high %v426, %v426
        %v431 = vlaneseq
        %v432 = vshrl.u32 %v431, 7
        %v433 = vsub.s32 0, %v432
        %v434 = vrot.slane %v356, %v433
        %v435 = vlaneseq
        %v436 = vshrl.u32 %v435, 7
        %v437 = vsub.s32 0, %v436
        %v438 = vrot.slane %v370, %v437
        %v439 = vlaneseq
        %v440 = vshrl.u32 %v439, 7
        %v441 = vsub.s32 0, %v440
        %v442 = vrot.slane %v378, %v441
        %v443 = vlaneseq
        %v444 = vshrl.u32 %v443, 7
        %v445 = vsub.s32 0, %v444
        %v446 = vrot.slane %v380, %v445
        %v447 = vlaneseq
        %v448 = vshrl.u32 %v447, 7
        %v449 = vsub.s32 0, %v448
        %v450 = vrot.slane %v363, %v449
        %v451 = vlaneseq
        %v452 = vshrl.u32 %v451, 7
        %v453 = vsub.s32 0, %v452
        %v454 = vrot.slane %v377, %v453
        %v455 = vlaneseq
        %v456 = vshrl.u32 %v455, 7
        %v457 = vsub.s32 0, %v456
        %v458 = vrot.slane %v379, %v457
        %v459 = vlaneseq
        %v460 = vshrl.u32 %v459, 7
        %v461 = vsub.s32 0, %v460
        %v462 = vrot.slane %v381, %v461
        %v463 = vlaneseq
        %v464 = vshrl.u32 %v463, 7
        %v465 = vsub.s32 0, %v464
        %v466 = vrot.slane %v405, %v465
        %v467 = vlaneseq
        %v468 = vshrl.u32 %v467, 7
        %v469 = vsub.s32 0, %v468
        %v470 = vrot.slane %v419, %v469
        %v471 = vlaneseq
        %v472 = vshrl.u32 %v471, 7
        %v473 = vsub.s32 0, %v472
        %v474 = vrot.slane %v427, %v473
        %v475 = vlaneseq
        %v476 = vshrl.u32 %v475, 7
        %v477 = vsub.s32 0, %v476
        %v478 = vrot.slane %v429, %v477
        %v479 = vlaneseq
        %v480 = vshrl.u32 %v479, 7
        %v481 = vsub.s32 0, %v480
        %v482 = vrot.slane %v412, %v481
        %v483 = vlaneseq
        %v484 = vshrl.u32 %v483, 7
        %v485 = vsub.s32 0, %v484
        %v486 = vrot.slane %v426, %v485
        %v487 = vlaneseq
        %v488 = vshrl.u32 %v487, 7
        %v489 = vsub.s32 0, %v488
        %v490 = vrot.slane %v428, %v489
        %v491 = vlaneseq
        %v492 = vshrl.u32 %v491, 7
        %v493 = vsub.s32 0, %v492
        %v494 = vrot.slane %v430, %v493
        %v511 = vmul.f32 %v434, %v329
        %v512 = vmul.f32 %v434, %v330
        %v513 = vmul.f32 %v438, %v329
        %v514 = vmul.f32 %v438, %v330
        %v515 = vmul.f32 %v442, %v329
        %v516 = vmul.f32 %v442, %v330
        %v517 = vmul.f32 %v446, %v329
        %v518 = vmul.f32 %v446, %v330
        %v519 = vmul.f32 %v450, %v329
        %v520 = vmul.f32 %v450, %v330
        %v521 = vmul.f32 %v454, %v329
        %v522 = vmul.f32 %v454, %v330
        %v523 = vmul.f32 %v458, %v329
        %v524 = vmul.f32 %v458, %v330
        %v525 = vmul.f32 %v462, %v329
        %v526 = vmul.f32 %v462, %v330
        %v527 = vmul.f32 %v466, %v329
        %v528 = vmul.f32 %v466, %v330
        %v529 = vmul.f32 %v470, %v329
        %v530 = vmul.f32 %v470, %v330
        %v531 = vmul.f32 %v474, %v329
        %v532 = vmul.f32 %v474, %v330
        %v533 = vmul.f32 %v478, %v329
        %v534 = vmul.f32 %v478, %v330
        %v535 = vmul.f32 %v482, %v329
        %v536 = vmul.f32 %v482, %v330
        %v537 = vmul.f32 %v486, %v329
        %v538 = vmul.f32 %v486, %v330
        %v539 = vmul.f32 %v490, %v329
        %v540 = vmul.f32 %v490, %v330
        %v541 = vmul.f32 %v494, %v329
        %v542 = vmul.f32 %v494, %v330
        %v543 = vld [vmem:[#allocation2] sm:$0xf]
        %v544 = vld [vmem:[%s199] sm:$0xff]
        %v546 = vcombine.high %v544, %v544
        %548 = vmatprep.subr.mxu0 0.0
        %549 = vmatpush1.msra.mxu0 %v526
        %550 = vmatprep.subr.mxu0 0.0
        %551 = vmatpush1.msra.mxu0 %v525
        %552 = vmatprep.subr.mxu0 0.0
        %553 = vmatpush1.msra.mxu0 %v524
        %554 = vmatprep.subr.mxu0 0.0
        %555 = vmatpush1.msra.mxu0 %v523
        %556 = vmatprep.subr.mxu0 0.0
        %557 = vmatpush1.msra.mxu0 %v522
        %558 = vmatprep.subr.mxu0 0.0
        %559 = vmatpush1.msra.mxu0 %v521
        %560 = vmatprep.subr.mxu0 0.0
        %561 = vmatpush1.msra.mxu0 %v520
        %562 = vmatprep.subr.mxu0 0.0
        %563 = vmatpush1.msra.mxu0 %v519
        %564 = vmatprep.subr.mxu0 0.0
        %565 = vmatpush1.msra.mxu0 %v518
        %566 = vmatprep.subr.mxu0 0.0
        %567 = vmatpush1.msra.mxu0 %v517
        %568 = vmatprep.subr.mxu0 0.0
        %569 = vmatpush1.msra.mxu0 %v516
        %570 = vmatprep.subr.mxu0 0.0
        %571 = vmatpush1.msra.mxu0 %v515
        %572 = vmatprep.subr.mxu0 0.0
        %573 = vmatpush1.msra.mxu0 %v514
        %574 = vmatprep.subr.mxu0 0.0
        %575 = vmatpush1.msra.mxu0 %v513
        %576 = vmatprep.subr.mxu0 0.0
        %577 = vmatpush1.msra.mxu0 %v512
        %578 = vmatprep.subr.mxu0 0.0
        %579 = vmatpush1.msra.mxu0 %v511
        %580 = vmatprep.subr.mxu0 0.0
        %581 = vmatpush2.msra.mxu0 %v542
        %582 = vmatprep.subr.mxu0 0.0
        %583 = vmatpush2.msra.mxu0 %v541
        %584 = vmatprep.subr.mxu0 0.0
        %585 = vmatpush2.msra.mxu0 %v540
        %586 = vmatprep.subr.mxu0 0.0
        %587 = vmatpush2.msra.mxu0 %v539
        %588 = vmatprep.subr.mxu0 0.0
        %589 = vmatpush2.msra.mxu0 %v538
        %590 = vmatprep.subr.mxu0 0.0
        %591 = vmatpush2.msra.mxu0 %v537
        %592 = vmatprep.subr.mxu0 0.0
        %593 = vmatpush2.msra.mxu0 %v536
        %594 = vmatprep.subr.mxu0 0.0
        %595 = vmatpush2.msra.mxu0 %v535
        %596 = vmatprep.subr.mxu0 0.0
        %597 = vmatpush2.msra.mxu0 %v534
        %598 = vmatprep.subr.mxu0 0.0
        %599 = vmatpush2.msra.mxu0 %v533
        %600 = vmatprep.subr.mxu0 0.0
        %601 = vmatpush2.msra.mxu0 %v532
        %602 = vmatprep.subr.mxu0 0.0
        %603 = vmatpush2.msra.mxu0 %v531
        %604 = vmatprep.subr.mxu0 0.0
        %605 = vmatpush2.msra.mxu0 %v530
        %606 = vmatprep.subr.mxu0 0.0
        %607 = vmatpush2.msra.mxu0 %v529
        %608 = vmatprep.subr.mxu0 0.0
        %609 = vmatpush2.msra.mxu0 %v528
        %610 = vmatprep.subr.mxu0 0.0
        %611 = vmatpush2.msra.mxu0 %v527
        %612 = vmatprep.mubr.f32.mxu0 %v546
        %613 = vmatmul.mubr.f32.gmra.mxu0 %v544
        %v614 = vpop.f32.mrf.mxu0
        %v615 = vadd.f32 0.0, %v614
        %v616 = vpop.f32.mrf.mxu0
        %617 = vdwg.mxu0
        %v618 = vadd.f32 %v543, %v615
        %619 = vst [vmem:[#allocation2] sm:$0xf] %v618
        // Predicated region
        $region41: #{tpu_custom_call.1} parent=27 // pred_check
          %p620 = pneg %p226
        $region42: #{tpu_custom_call.1} parent=27 // pred_check_branch
          %622 = sbr.rel (%p620) target = $region44
        $region43: #{tpu_custom_call.1} parent=27 // pred_region
          %v623 = vld [vmem:[#allocation2] sm:$0xf]
          %624 = vst [vmem:[%s224] sm:$0xf] %v623
        $region44: #{tpu_custom_call.1} parent=27 // pred_fallthru
          _
        %s625 = sand.u32 %s107, 1
        %s626 = scalar_lea.sflag [#allocation5], %s625
        %s627 = sand.u32 %s107, 1
        %s628 = smul.addr %s627, 4
        %s629 = scalar_lea.vmem [#allocation8], %s628
        // Predicated region
        $region45: #{tpu_custom_call.1} parent=27 // pred_check
          %p630 = pneg %p117
        $region46: #{tpu_custom_call.1} parent=27 // pred_check_branch
          %632 = sbr.rel (%p630) target = $region48
        $region47: #{tpu_custom_call.1} parent=27 // pred_region
          %s634 = ssub.s32 64, 64
          %635 = vsyncadd %s626, %s634
          %s636 = sadd.s32 %s28, %s27
          %s637 = smul.addr %s636, 64
          %s638 = scalar_lea.hbm %s2, %s637
          %s640 = sshll.u32 %s629, 4
          %s641 = int_to_ptr.vmem [resolvable:$true] %s640
          %643 = dma.vmem_to_hbm [thread:$0]  %s641, 64, %s638, %s626
        $region48: #{tpu_custom_call.1} parent=27 // pred_fallthru
          _
      $region28: #{tpu_custom_call.1} parent=5 // pred_fallthru
        _
      %p644 = scmp.le.s32.totalorder 2, %s17
      // Predicated region
      $region49: #{tpu_custom_call.1} parent=5 // pred_check
        %p645 = pneg %p644
      $region50: #{tpu_custom_call.1} parent=5 // pred_check_branch
        %647 = sbr.rel (%p645) target = $region52
      $region51: #{tpu_custom_call.1} parent=5 // pred_region
        %s648 = ssub.s32 %s17, 2
        // Predicated region
        $region53: #{tpu_custom_call.1} parent=51 // pred_check
          %p649 = pneg %p123
        $region54: #{tpu_custom_call.1} parent=51 // pred_check_branch
          %651 = sbr.rel (%p649) target = $region56
        $region55: #{tpu_custom_call.1} parent=51 // pred_region
          %s652 = sand.u32 %s108, 1
          %s653 = scalar_lea.sflag [#allocation5], %s652
          %s654 = sand.u32 %s108, 1
          %s655 = smul.addr %s654, 4
          %s656 = scalar_lea.vmem [#allocation8], %s655
          %657 = dma.done %s653, 64
        $region56: #{tpu_custom_call.1} parent=51 // pred_fallthru
          _
      $region52: #{tpu_custom_call.1} parent=5 // pred_fallthru
        _
    $region6: #{tpu_custom_call.1} parent=1 // loop_footer
      %s21 = sadd.s32 1, %s17
    $region7: #{tpu_custom_call.1} parent=1 // loop_footer_branch
      %16 = sbr.rel target = $region3
    $region8: #{tpu_custom_call.1} parent=1 // loop_exit
      _
    %658 = vsyncpa [#allocation4], 1
    %s659 = scalar_lea.sflag [#allocation4], 1
    %660 = vsyncpa %s659, 1
    %661 = vsyncpa [#allocation7], 1
    %s662 = scalar_lea.sflag [#allocation7], 1
    %663 = vsyncpa %s662, 1
    %664 = vsyncpa [#allocation5], 1
    %s665 = scalar_lea.sflag [#allocation5], 1
    %666 = vsyncpa %s665, 1

</llo_original>
